<compile_context>
chip_gen: v7x
topology: tpu7x:2x2x1
jax: 0.10.0
libtpu: 0.0.40
codegen_flags: <defaults>
</compile_context>

<pallas_src>
import jax
import jax.numpy as jnp
from jax.experimental import pallas as pl
from jax.experimental.pallas import tpu as pltpu


# ---------------------------------------------------------------------------
# Kernel
# ---------------------------------------------------------------------------
def autoencoder_kernel(x_ref,
                       w1_ref, b1_ref, w2_ref, b2_ref, w3_ref, b3_ref,
                       w4_ref, b4_ref, w5_ref, b5_ref, w6_ref, b6_ref,
                       out_ref):
    # x_ref: [tb/2, 128]  (two 64-feature samples packed per row)
    h = x_ref[...]

    # ---- encode ----
    h = jnp.dot(h, w1_ref[...], preferred_element_type=jnp.float32) + b1_ref[...]
    h = jnp.tanh(h)
    h = jnp.dot(h, w2_ref[...], preferred_element_type=jnp.float32) + b2_ref[...]
    h = jnp.tanh(h)
    h = jnp.dot(h, w3_ref[...], preferred_element_type=jnp.float32) + b3_ref[...]

    # ---- decode ----
    h = jnp.tanh(h)
    h = jnp.dot(h, w4_ref[...], preferred_element_type=jnp.float32) + b4_ref[...]
    h = jnp.tanh(h)
    h = jnp.dot(h, w5_ref[...], preferred_element_type=jnp.float32) + b5_ref[...]
    h = jnp.tanh(h)
    h = jnp.dot(h, w6_ref[...], preferred_element_type=jnp.float32) + b6_ref[...]

    out_ref[...] = h.astype(out_ref.dtype)  # [tb/2, 128] lane-dense store


# ---------------------------------------------------------------------------
# Parameter packing: diag(W, W) so two samples share one 128-lane row
# ---------------------------------------------------------------------------
def _block_diag2(w):
    fin, fout = w.shape
    z = jnp.zeros((fin, fout), w.dtype)
    top = jnp.concatenate([w, z], axis=1)
    bot = jnp.concatenate([z, w], axis=1)
    return jnp.concatenate([top, bot], axis=0)  # [2*fin, 2*fout]


def _pack_params(params):
    packed = []
    for w_t, b in params:
        packed.append((_block_diag2(w_t), jnp.concatenate([b, b], axis=1)))
    return packed


def _round_up(n, m):
    return ((n + m - 1) // m) * m


# ---------------------------------------------------------------------------
# Wrapper
# ---------------------------------------------------------------------------
def autoencoder_forward(x, params, *, block_rows=1024):
    """x: [B, 64] float32. params: list of (W_t [in,out], b [1,out]) pairs."""
    B, F = x.shape
    out_dim = params[-1][0].shape[1]          # 64

    # Batch tile: multiple of 16 so the packed (tb/2, 128) block keeps the
    # sublane dim a multiple of 8.
    tb = min(_round_up(block_rows, 16), _round_up(B, 16))
    Bp = _round_up(B, tb)
    if Bp != B:
        x = jnp.pad(x, ((0, Bp - B), (0, 0)))

    # Lane-dense view: two samples per 128-lane row.
    x2 = x.reshape(Bp // 2, 2 * F)

    packed = _pack_params(params)
    flat = []
    in_specs = [pl.BlockSpec((tb // 2, 2 * F), lambda i: (i, 0))]
    for w2, b2 in packed:
        flat.append(w2)
        flat.append(b2)
        # Constant index maps -> weights/biases stay resident in VMEM.
        in_specs.append(pl.BlockSpec(w2.shape, lambda i: (0, 0)))
        in_specs.append(pl.BlockSpec(b2.shape, lambda i: (0, 0)))

    grid = (Bp // tb,)

    flops_per_row = 2 * (64 * 32 + 32 * 16 + 16 * 8 + 8 * 16 + 16 * 32 + 32 * 64)
    trans_per_row = 32 + 16 + 8 + 16 + 32
    weight_bytes = sum(int(w.size + b.size) for w, b in packed) * 4
    cost = pl.CostEstimate(
        flops=Bp * flops_per_row,
        transcendentals=Bp * trans_per_row,
        bytes_accessed=Bp * (F + out_dim) * 4 + weight_bytes,
    )

    out2 = pl.pallas_call(
        autoencoder_kernel,
        out_shape=jax.ShapeDtypeStruct((Bp // 2, 2 * out_dim), jnp.float32),
        grid_spec=pl.GridSpec(
            grid=grid,
            in_specs=in_specs,
            out_specs=pl.BlockSpec((tb // 2, 2 * out_dim), lambda i: (i, 0)),
        ),
        compiler_params=pltpu.CompilerParams(
            dimension_semantics=("parallel",),
        ),
        cost_estimate=cost,
    )(x2, *flat)

    return out2.reshape(Bp, out_dim)[:B]


# ---------------------------------------------------------------------------
# Parameter init (matches PyTorch: xavier_normal_ weights, bias = 0.01)
# ---------------------------------------------------------------------------
def xavier_normal(key, out_features, in_features):
    std = (2.0 / (in_features + out_features)) ** 0.5
    return jax.random.normal(key, (out_features, in_features), jnp.float32) * std


def make_params(key):
    dims = [(64, 32), (32, 16), (16, 8), (8, 16), (16, 32), (32, 64)]
    params = []
    keys = jax.random.split(key, len(dims))
    for k, (fin, fout) in zip(keys, dims):
        w = xavier_normal(k, fout, fin)              # torch layout: [out, in]
        b = jnp.full((1, fout), 0.01, jnp.float32)
        params.append((jnp.asarray(w.T), b))         # stored as [in, out]
    return params


def reference_forward(x, params):
    h = x
    h = jnp.tanh(h @ params[0][0] + params[0][1])
    h = jnp.tanh(h @ params[1][0] + params[1][1])
    h = h @ params[2][0] + params[2][1]
    h = jnp.tanh(h)
    h = jnp.tanh(h @ params[3][0] + params[3][1])
    h = jnp.tanh(h @ params[4][0] + params[4][1])
    h = h @ params[5][0] + params[5][1]
    return h


if __name__ == "__main__":
    key = jax.random.PRNGKey(0)
    k_x, k_p = jax.random.split(key)

    # Small demo shape; non-multiple batch exercises padding, small block_rows
    # exercises a multi-step pipelined grid.
    B = 200
    x = jax.random.normal(k_x, (B, 64), dtype=jnp.float32)
    params = make_params(k_p)

    out = autoencoder_forward(x, params, block_rows=64)
    out = jax.block_until_ready(out)

    ref = reference_forward(x, params)
    assert out.shape == (B, 64)
    assert jnp.allclose(out, ref, atol=1e-4, rtol=1e-4), "mismatch vs reference"

    print("KERNEL_OK")
</pallas_src>

<mosaic_0001>
module attributes {stable_mosaic.version = 11 : i64} {
  func.func @autoencoder_kernel(%arg0: i32, %arg1: memref<32x128xf32, #tpu.memory_space<vmem>>, %arg2: memref<128x64xf32, #tpu.memory_space<vmem>>, %arg3: memref<1x64xf32, #tpu.memory_space<vmem>>, %arg4: memref<64x32xf32, #tpu.memory_space<vmem>>, %arg5: memref<1x32xf32, #tpu.memory_space<vmem>>, %arg6: memref<32x16xf32, #tpu.memory_space<vmem>>, %arg7: memref<1x16xf32, #tpu.memory_space<vmem>>, %arg8: memref<16x32xf32, #tpu.memory_space<vmem>>, %arg9: memref<1x32xf32, #tpu.memory_space<vmem>>, %arg10: memref<32x64xf32, #tpu.memory_space<vmem>>, %arg11: memref<1x64xf32, #tpu.memory_space<vmem>>, %arg12: memref<64x128xf32, #tpu.memory_space<vmem>>, %arg13: memref<1x128xf32, #tpu.memory_space<vmem>>, %arg14: memref<32x128xf32, #tpu.memory_space<vmem>>) attributes {dimension_semantics = [#tpu.dimension_semantics<parallel>], iteration_bounds = array<i64: 4>, scalar_prefetch = 0 : i64, scratch_operands = 0 : i64, tpu.core_type = #tpu.core_type<tc>, window_params = [{transform_indices = @transform_0, window_bounds = array<i64: 32, 128>}, {pipeline_mode = #tpu.pipeline_mode<synchronous>, transform_indices = @transform_1, window_bounds = array<i64: 128, 64>}, {pipeline_mode = #tpu.pipeline_mode<synchronous>, transform_indices = @transform_2, window_bounds = array<i64: 1, 64>}, {pipeline_mode = #tpu.pipeline_mode<synchronous>, transform_indices = @transform_3, window_bounds = array<i64: 64, 32>}, {pipeline_mode = #tpu.pipeline_mode<synchronous>, transform_indices = @transform_4, window_bounds = array<i64: 1, 32>}, {pipeline_mode = #tpu.pipeline_mode<synchronous>, transform_indices = @transform_5, window_bounds = array<i64: 32, 16>}, {pipeline_mode = #tpu.pipeline_mode<synchronous>, transform_indices = @transform_6, window_bounds = array<i64: 1, 16>}, {pipeline_mode = #tpu.pipeline_mode<synchronous>, transform_indices = @transform_7, window_bounds = array<i64: 16, 32>}, {pipeline_mode = #tpu.pipeline_mode<synchronous>, transform_indices = @transform_8, window_bounds = array<i64: 1, 32>}, {pipeline_mode = #tpu.pipeline_mode<synchronous>, transform_indices = @transform_9, window_bounds = array<i64: 32, 64>}, {pipeline_mode = #tpu.pipeline_mode<synchronous>, transform_indices = @transform_10, window_bounds = array<i64: 1, 64>}, {pipeline_mode = #tpu.pipeline_mode<synchronous>, transform_indices = @transform_11, window_bounds = array<i64: 64, 128>}, {pipeline_mode = #tpu.pipeline_mode<synchronous>, transform_indices = @transform_12, window_bounds = array<i64: 1, 128>}, {transform_indices = @transform_13, window_bounds = array<i64: 32, 128>}]} {
    %c0 = arith.constant 0 : index
    %c0_0 = arith.constant 0 : index
    %0 = vector.load %arg1[%c0, %c0_0] : memref<32x128xf32, #tpu.memory_space<vmem>>, vector<32x128xf32>
    %c0_1 = arith.constant 0 : index
    %c0_2 = arith.constant 0 : index
    %1 = vector.load %arg2[%c0_1, %c0_2] : memref<128x64xf32, #tpu.memory_space<vmem>>, vector<128x64xf32>
    %cst = arith.constant dense<0.000000e+00> : vector<32x64xf32>
    %2 = tpu.matmul %0, %1, %cst {dimension_numbers = #tpu.dot_dimension_numbers<[1], [0], [0], [1], [0, 0, 1, 1], [], []>} : vector<32x128xf32>, vector<128x64xf32>, vector<32x64xf32> -> vector<32x64xf32>
    %c0_3 = arith.constant 0 : index
    %c0_4 = arith.constant 0 : index
    %3 = vector.load %arg3[%c0_3, %c0_4] : memref<1x64xf32, #tpu.memory_space<vmem>>, vector<1x64xf32>
    %4 = vector.broadcast %3 : vector<1x64xf32> to vector<32x64xf32>
    %5 = arith.addf %2, %4 : vector<32x64xf32>
    %6 = math.tanh %5 : vector<32x64xf32>
    %c0_5 = arith.constant 0 : index
    %c0_6 = arith.constant 0 : index
    %7 = vector.load %arg4[%c0_5, %c0_6] : memref<64x32xf32, #tpu.memory_space<vmem>>, vector<64x32xf32>
    %cst_7 = arith.constant dense<0.000000e+00> : vector<32x32xf32>
    %8 = tpu.matmul %6, %7, %cst_7 {dimension_numbers = #tpu.dot_dimension_numbers<[1], [0], [0], [1], [0, 0, 1, 1], [], []>} : vector<32x64xf32>, vector<64x32xf32>, vector<32x32xf32> -> vector<32x32xf32>
    %c0_8 = arith.constant 0 : index
    %c0_9 = arith.constant 0 : index
    %9 = vector.load %arg5[%c0_8, %c0_9] : memref<1x32xf32, #tpu.memory_space<vmem>>, vector<1x32xf32>
    %10 = vector.broadcast %9 : vector<1x32xf32> to vector<32x32xf32>
    %11 = arith.addf %8, %10 : vector<32x32xf32>
    %12 = math.tanh %11 : vector<32x32xf32>
    %c0_10 = arith.constant 0 : index
    %c0_11 = arith.constant 0 : index
    %13 = vector.load %arg6[%c0_10, %c0_11] : memref<32x16xf32, #tpu.memory_space<vmem>>, vector<32x16xf32>
    %cst_12 = arith.constant dense<0.000000e+00> : vector<32x16xf32>
    %14 = tpu.matmul %12, %13, %cst_12 {dimension_numbers = #tpu.dot_dimension_numbers<[1], [0], [0], [1], [0, 0, 1, 1], [], []>} : vector<32x32xf32>, vector<32x16xf32>, vector<32x16xf32> -> vector<32x16xf32>
    %c0_13 = arith.constant 0 : index
    %c0_14 = arith.constant 0 : index
    %15 = vector.load %arg7[%c0_13, %c0_14] : memref<1x16xf32, #tpu.memory_space<vmem>>, vector<1x16xf32>
    %16 = vector.broadcast %15 : vector<1x16xf32> to vector<32x16xf32>
    %17 = arith.addf %14, %16 : vector<32x16xf32>
    %18 = math.tanh %17 : vector<32x16xf32>
    %c0_15 = arith.constant 0 : index
    %c0_16 = arith.constant 0 : index
    %19 = vector.load %arg8[%c0_15, %c0_16] : memref<16x32xf32, #tpu.memory_space<vmem>>, vector<16x32xf32>
    %cst_17 = arith.constant dense<0.000000e+00> : vector<32x32xf32>
    %20 = tpu.matmul %18, %19, %cst_17 {dimension_numbers = #tpu.dot_dimension_numbers<[1], [0], [0], [1], [0, 0, 1, 1], [], []>} : vector<32x16xf32>, vector<16x32xf32>, vector<32x32xf32> -> vector<32x32xf32>
    %c0_18 = arith.constant 0 : index
    %c0_19 = arith.constant 0 : index
    %21 = vector.load %arg9[%c0_18, %c0_19] : memref<1x32xf32, #tpu.memory_space<vmem>>, vector<1x32xf32>
    %22 = vector.broadcast %21 : vector<1x32xf32> to vector<32x32xf32>
    %23 = arith.addf %20, %22 : vector<32x32xf32>
    %24 = math.tanh %23 : vector<32x32xf32>
    %c0_20 = arith.constant 0 : index
    %c0_21 = arith.constant 0 : index
    %25 = vector.load %arg10[%c0_20, %c0_21] : memref<32x64xf32, #tpu.memory_space<vmem>>, vector<32x64xf32>
    %cst_22 = arith.constant dense<0.000000e+00> : vector<32x64xf32>
    %26 = tpu.matmul %24, %25, %cst_22 {dimension_numbers = #tpu.dot_dimension_numbers<[1], [0], [0], [1], [0, 0, 1, 1], [], []>} : vector<32x32xf32>, vector<32x64xf32>, vector<32x64xf32> -> vector<32x64xf32>
    %c0_23 = arith.constant 0 : index
    %c0_24 = arith.constant 0 : index
    %27 = vector.load %arg11[%c0_23, %c0_24] : memref<1x64xf32, #tpu.memory_space<vmem>>, vector<1x64xf32>
    %28 = vector.broadcast %27 : vector<1x64xf32> to vector<32x64xf32>
    %29 = arith.addf %26, %28 : vector<32x64xf32>
    %30 = math.tanh %29 : vector<32x64xf32>
    %c0_25 = arith.constant 0 : index
    %c0_26 = arith.constant 0 : index
    %31 = vector.load %arg12[%c0_25, %c0_26] : memref<64x128xf32, #tpu.memory_space<vmem>>, vector<64x128xf32>
    %cst_27 = arith.constant dense<0.000000e+00> : vector<32x128xf32>
    %32 = tpu.matmul %30, %31, %cst_27 {dimension_numbers = #tpu.dot_dimension_numbers<[1], [0], [0], [1], [0, 0, 1, 1], [], []>} : vector<32x64xf32>, vector<64x128xf32>, vector<32x128xf32> -> vector<32x128xf32>
    %c0_28 = arith.constant 0 : index
    %c0_29 = arith.constant 0 : index
    %33 = vector.load %arg13[%c0_28, %c0_29] : memref<1x128xf32, #tpu.memory_space<vmem>>, vector<1x128xf32>
    %34 = vector.broadcast %33 : vector<1x128xf32> to vector<32x128xf32>
    %35 = arith.addf %32, %34 : vector<32x128xf32>
    %c0_30 = arith.constant 0 : index
    %c0_31 = arith.constant 0 : index
    %36 = vector.load %arg14[%c0_30, %c0_31] : memref<32x128xf32, #tpu.memory_space<vmem>>, vector<32x128xf32>
    tpu.vector_store %arg14[%c0_30, %c0_31], %35 {strides = array<i32>} : memref<32x128xf32, #tpu.memory_space<vmem>>, vector<32x128xf32>,
    return
  }
  func.func @transform_0(%arg0: i32) -> (i32, i32) {
    %c0_i32 = arith.constant 0 : i32
    %c0_i32_0 = arith.constant 0 : i32
    return %arg0, %c0_i32 : i32, i32
  }
  func.func @transform_1(%arg0: i32) -> (i32, i32) {
    %c0_i32 = arith.constant 0 : i32
    %c0_i32_0 = arith.constant 0 : i32
    %c0_i32_1 = arith.constant 0 : i32
    return %c0_i32, %c0_i32_0 : i32, i32
  }
  func.func @transform_2(%arg0: i32) -> (i32, i32) {
    %c0_i32 = arith.constant 0 : i32
    %c0_i32_0 = arith.constant 0 : i32
    %c0_i32_1 = arith.constant 0 : i32
    return %c0_i32, %c0_i32_0 : i32, i32
  }
  func.func @transform_3(%arg0: i32) -> (i32, i32) {
    %c0_i32 = arith.constant 0 : i32
    %c0_i32_0 = arith.constant 0 : i32
    %c0_i32_1 = arith.constant 0 : i32
    return %c0_i32, %c0_i32_0 : i32, i32
  }
  func.func @transform_4(%arg0: i32) -> (i32, i32) {
    %c0_i32 = arith.constant 0 : i32
    %c0_i32_0 = arith.constant 0 : i32
    %c0_i32_1 = arith.constant 0 : i32
    return %c0_i32, %c0_i32_0 : i32, i32
  }
  func.func @transform_5(%arg0: i32) -> (i32, i32) {
    %c0_i32 = arith.constant 0 : i32
    %c0_i32_0 = arith.constant 0 : i32
    %c0_i32_1 = arith.constant 0 : i32
    return %c0_i32, %c0_i32_0 : i32, i32
  }
  func.func @transform_6(%arg0: i32) -> (i32, i32) {
    %c0_i32 = arith.constant 0 : i32
    %c0_i32_0 = arith.constant 0 : i32
    %c0_i32_1 = arith.constant 0 : i32
    return %c0_i32, %c0_i32_0 : i32, i32
  }
  func.func @transform_7(%arg0: i32) -> (i32, i32) {
    %c0_i32 = arith.constant 0 : i32
    %c0_i32_0 = arith.constant 0 : i32
    %c0_i32_1 = arith.constant 0 : i32
    return %c0_i32, %c0_i32_0 : i32, i32
  }
  func.func @transform_8(%arg0: i32) -> (i32, i32) {
    %c0_i32 = arith.constant 0 : i32
    %c0_i32_0 = arith.constant 0 : i32
    %c0_i32_1 = arith.constant 0 : i32
    return %c0_i32, %c0_i32_0 : i32, i32
  }
  func.func @transform_9(%arg0: i32) -> (i32, i32) {
    %c0_i32 = arith.constant 0 : i32
    %c0_i32_0 = arith.constant 0 : i32
    %c0_i32_1 = arith.constant 0 : i32
    return %c0_i32, %c0_i32_0 : i32, i32
  }
  func.func @transform_10(%arg0: i32) -> (i32, i32) {
    %c0_i32 = arith.constant 0 : i32
    %c0_i32_0 = arith.constant 0 : i32
    %c0_i32_1 = arith.constant 0 : i32
    return %c0_i32, %c0_i32_0 : i32, i32
  }
  func.func @transform_11(%arg0: i32) -> (i32, i32) {
    %c0_i32 = arith.constant 0 : i32
    %c0_i32_0 = arith.constant 0 : i32
    %c0_i32_1 = arith.constant 0 : i32
    return %c0_i32, %c0_i32_0 : i32, i32
  }
  func.func @transform_12(%arg0: i32) -> (i32, i32) {
    %c0_i32 = arith.constant 0 : i32
    %c0_i32_0 = arith.constant 0 : i32
    %c0_i32_1 = arith.constant 0 : i32
    return %c0_i32, %c0_i32_0 : i32, i32
  }
  func.func @transform_13(%arg0: i32) -> (i32, i32) {
    %c0_i32 = arith.constant 0 : i32
    %c0_i32_0 = arith.constant 0 : i32
    return %arg0, %c0_i32 : i32, i32
  }
}

</mosaic_0001>

<llo_original>
// kernel: tpu_custom_call.1
$region0: #{tpu_custom_call.1}
  #allocation0 [shape = 'u32[]', space=smem, size = 0x4, offset = 0x4, fixed_abs, tag = 'smem constant byte address 0x4 - core index']
  #allocation1 [shape = 'u32[144,128]{1,0:T(1,128)}', space=vmem, size = 0x12000, scoped, tag = 'internal scratch']
  %s0 = inlined_call_operand.vmem [shape: f32[128,128], index: 0, kind: input, shape index: {}]
  %s1 = inlined_call_operand.vmem [shape: f32[128,64], index: 1, kind: input, shape index: {}]
  %s2 = inlined_call_operand.vmem [shape: f32[1,64], index: 2, kind: input, shape index: {}]
  %s3 = inlined_call_operand.vmem [shape: f32[64,32], index: 3, kind: input, shape index: {}]
  %s4 = inlined_call_operand.vmem [shape: f32[1,32], index: 4, kind: input, shape index: {}]
  %s5 = inlined_call_operand.vmem [shape: f32[32,16], index: 5, kind: input, shape index: {}]
  %s6 = inlined_call_operand.vmem [shape: f32[1,16], index: 6, kind: input, shape index: {}]
  %s7 = inlined_call_operand.vmem [shape: f32[16,32], index: 7, kind: input, shape index: {}]
  %s8 = inlined_call_operand.vmem [shape: f32[1,32], index: 8, kind: input, shape index: {}]
  %s9 = inlined_call_operand.vmem [shape: f32[32,64], index: 9, kind: input, shape index: {}]
  %s10 = inlined_call_operand.vmem [shape: f32[1,64], index: 10, kind: input, shape index: {}]
  %s11 = inlined_call_operand.vmem [shape: f32[64,128], index: 11, kind: input, shape index: {}]
  %s12 = inlined_call_operand.vmem [shape: f32[1,128], index: 12, kind: input, shape index: {}]
  %s13 = inlined_call_operand.hbm [shape: f32[128,128], index: 13, kind: output, shape index: {}]
  %s14 = sld [smem:[#allocation0]]
  $region85: #{tpu_custom_call.1} parent=0
    _
  %s16 = ssub.s32 1, %s14
  %s17 = scalar_select 0, %s16, %s14
  $region1: #{tpu_custom_call.1} parent=0
    #allocation2 [shape = 'u8[32768]{0}', space=vmem, size = 0x8000, scoped, tag = 'output window, operand 0']
    #allocation3 [shape = 's32[2]{0}', space=sflag, size = 0x8, scoped, tag = 'scoped memory for tpu_custom_call.1']
    %18 = vsyncpa [#allocation3], 0
    %s19 = scalar_lea.sflag [#allocation3], 1
    %20 = vsyncpa %s19, 0
    loop: start=0, step=1, limit=6
    $region2: #{tpu_custom_call.1} parent=1 // loop_pre_header
      _
    $region3: #{tpu_custom_call.1} parent=1 // loop_header
      %s22 = sphi 0, %s26
      %p23 = scmp.ge.s32.totalorder %s22, 6
      %s32 = sphi 0, %s34
      %s35 = sphi 0, %s32
      %s36 = sphi 0, %s35
      %s52 = sphi 0, %s36
      %s56 = sphi 0, %s56
      %s58 = sphi 0, %s56
      %s59 = sphi 0, %s58
      %s73 = sphi 0, %s59
      %s77 = sphi 0, %s77
      %s79 = sphi 0, %s77
      %s80 = sphi 0, %s79
      %s94 = sphi 0, %s80
      %s98 = sphi 0, %s98
      %s100 = sphi 0, %s98
      %s101 = sphi 0, %s100
      %s115 = sphi 0, %s101
      %s119 = sphi 0, %s119
      %s121 = sphi 0, %s119
      %s122 = sphi 0, %s121
      %s136 = sphi 0, %s122
      %s140 = sphi 0, %s140
      %s142 = sphi 0, %s140
      %s143 = sphi 0, %s142
      %s157 = sphi 0, %s143
      %s161 = sphi 0, %s161
      %s163 = sphi 0, %s161
      %s164 = sphi 0, %s163
      %s178 = sphi 0, %s164
      %s182 = sphi 0, %s182
      %s184 = sphi 0, %s182
      %s185 = sphi 0, %s184
      %s199 = sphi 0, %s185
      %s203 = sphi 0, %s203
      %s205 = sphi 0, %s203
      %s206 = sphi 0, %s205
      %s220 = sphi 0, %s206
      %s224 = sphi 0, %s224
      %s226 = sphi 0, %s224
      %s227 = sphi 0, %s226
      %s241 = sphi 0, %s227
      %s245 = sphi 0, %s245
      %s247 = sphi 0, %s245
      %s248 = sphi 0, %s247
      %s262 = sphi 0, %s248
      %s266 = sphi 0, %s266
      %s268 = sphi 0, %s266
      %s269 = sphi 0, %s268
      %s283 = sphi 0, %s269
      %s287 = sphi 0, %s287
      %s289 = sphi 0, %s287
      %s290 = sphi 0, %s289
      %s304 = sphi 0, %s290
      %s310 = sphi 0, %s312
      %s313 = sphi 0, %s310
      %s314 = sphi 0, %s313
      %s330 = sphi 0, %s314
    $region4: #{tpu_custom_call.1} parent=1 // loop_header_branch
      %25 = sbr.rel (%p23) target = $region8
    $region5: #{tpu_custom_call.1} parent=1 // loop_body
      %s27 = ssub.s32 %s22, 1
      %s28 = ssub.s32 %s22, 2
      %s29 = sadd.s32 %s22, 1
      %s30 = ssub.s32 %s22, %s29
      %p31 = scmp.eq.s32.totalorder %s30, 0
      %s33 = sadd.s32 %s32, 1
      %s34 = scalar_select %p31, %s32, %s33
      %p37 = pneg %p31
      %p38 = scmp.eq.s32.totalorder %s22, 3
      %p39 = por %p37, %p38
      %p40 = scmp.ne.s32.totalorder %s32, %s35
      %p41 = scmp.eq.s32.totalorder %s22, 0
      %p42 = por %p40, %p41
      %p43 = scmp.ne.s32.totalorder %s32, %s35
      %p44 = scmp.eq.s32.totalorder %s27, 3
      %p45 = por %p43, %p44
      %p46 = scmp.ne.s32.totalorder %s35, %s36
      %p47 = scmp.eq.s32.totalorder %s27, 0
      %p48 = por %p46, %p47
      %p49 = scmp.ne.s32.totalorder %s35, %s36
      %p50 = scmp.eq.s32.totalorder %s28, 3
      %p51 = por %p49, %p50
      %p53 = scmp.ne.s32.totalorder %s36, %s52
      %p54 = scmp.eq.s32.totalorder %s28, 0
      %p55 = por %p53, %p54
      %s57 = sadd.s32 %s56, 1
      %p60 = scmp.eq.s32.totalorder %s22, 3
      %p61 = scmp.ne.s32.totalorder %s56, %s58
      %p62 = scmp.eq.s32.totalorder %s22, 0
      %p63 = por %p61, %p62
      %p64 = scmp.ne.s32.totalorder %s56, %s58
      %p65 = scmp.eq.s32.totalorder %s27, 3
      %p66 = por %p64, %p65
      %p67 = scmp.ne.s32.totalorder %s58, %s59
      %p68 = scmp.eq.s32.totalorder %s27, 0
      %p69 = por %p67, %p68
      %p70 = scmp.ne.s32.totalorder %s58, %s59
      %p71 = scmp.eq.s32.totalorder %s28, 3
      %p72 = por %p70, %p71
      %p74 = scmp.ne.s32.totalorder %s59, %s73
      %p75 = scmp.eq.s32.totalorder %s28, 0
      %p76 = por %p74, %p75
      %s78 = sadd.s32 %s77, 1
      %p81 = scmp.eq.s32.totalorder %s22, 3
      %p82 = scmp.ne.s32.totalorder %s77, %s79
      %p83 = scmp.eq.s32.totalorder %s22, 0
      %p84 = por %p82, %p83
      %p85 = scmp.ne.s32.totalorder %s77, %s79
      %p86 = scmp.eq.s32.totalorder %s27, 3
      %p87 = por %p85, %p86
      %p88 = scmp.ne.s32.totalorder %s79, %s80
      %p89 = scmp.eq.s32.totalorder %s27, 0
      %p90 = por %p88, %p89
      %p91 = scmp.ne.s32.totalorder %s79, %s80
      %p92 = scmp.eq.s32.totalorder %s28, 3
      %p93 = por %p91, %p92
      %p95 = scmp.ne.s32.totalorder %s80, %s94
      %p96 = scmp.eq.s32.totalorder %s28, 0
      %p97 = por %p95, %p96
      %s99 = sadd.s32 %s98, 1
      %p102 = scmp.eq.s32.totalorder %s22, 3
      %p103 = scmp.ne.s32.totalorder %s98, %s100
      %p104 = scmp.eq.s32.totalorder %s22, 0
      %p105 = por %p103, %p104
      %p106 = scmp.ne.s32.totalorder %s98, %s100
      %p107 = scmp.eq.s32.totalorder %s27, 3
      %p108 = por %p106, %p107
      %p109 = scmp.ne.s32.totalorder %s100, %s101
      %p110 = scmp.eq.s32.totalorder %s27, 0
      %p111 = por %p109, %p110
      %p112 = scmp.ne.s32.totalorder %s100, %s101
      %p113 = scmp.eq.s32.totalorder %s28, 3
      %p114 = por %p112, %p113
      %p116 = scmp.ne.s32.totalorder %s101, %s115
      %p117 = scmp.eq.s32.totalorder %s28, 0
      %p118 = por %p116, %p117
      %s120 = sadd.s32 %s119, 1
      %p123 = scmp.eq.s32.totalorder %s22, 3
      %p124 = scmp.ne.s32.totalorder %s119, %s121
      %p125 = scmp.eq.s32.totalorder %s22, 0
      %p126 = por %p124, %p125
      %p127 = scmp.ne.s32.totalorder %s119, %s121
      %p128 = scmp.eq.s32.totalorder %s27, 3
      %p129 = por %p127, %p128
      %p130 = scmp.ne.s32.totalorder %s121, %s122
      %p131 = scmp.eq.s32.totalorder %s27, 0
      %p132 = por %p130, %p131
      %p133 = scmp.ne.s32.totalorder %s121, %s122
      %p134 = scmp.eq.s32.totalorder %s28, 3
      %p135 = por %p133, %p134
      %p137 = scmp.ne.s32.totalorder %s122, %s136
      %p138 = scmp.eq.s32.totalorder %s28, 0
      %p139 = por %p137, %p138
      %s141 = sadd.s32 %s140, 1
      %p144 = scmp.eq.s32.totalorder %s22, 3
      %p145 = scmp.ne.s32.totalorder %s140, %s142
      %p146 = scmp.eq.s32.totalorder %s22, 0
      %p147 = por %p145, %p146
      %p148 = scmp.ne.s32.totalorder %s140, %s142
      %p149 = scmp.eq.s32.totalorder %s27, 3
      %p150 = por %p148, %p149
      %p151 = scmp.ne.s32.totalorder %s142, %s143
      %p152 = scmp.eq.s32.totalorder %s27, 0
      %p153 = por %p151, %p152
      %p154 = scmp.ne.s32.totalorder %s142, %s143
      %p155 = scmp.eq.s32.totalorder %s28, 3
      %p156 = por %p154, %p155
      %p158 = scmp.ne.s32.totalorder %s143, %s157
      %p159 = scmp.eq.s32.totalorder %s28, 0
      %p160 = por %p158, %p159
      %s162 = sadd.s32 %s161, 1
      %p165 = scmp.eq.s32.totalorder %s22, 3
      %p166 = scmp.ne.s32.totalorder %s161, %s163
      %p167 = scmp.eq.s32.totalorder %s22, 0
      %p168 = por %p166, %p167
      %p169 = scmp.ne.s32.totalorder %s161, %s163
      %p170 = scmp.eq.s32.totalorder %s27, 3
      %p171 = por %p169, %p170
      %p172 = scmp.ne.s32.totalorder %s163, %s164
      %p173 = scmp.eq.s32.totalorder %s27, 0
      %p174 = por %p172, %p173
      %p175 = scmp.ne.s32.totalorder %s163, %s164
      %p176 = scmp.eq.s32.totalorder %s28, 3
      %p177 = por %p175, %p176
      %p179 = scmp.ne.s32.totalorder %s164, %s178
      %p180 = scmp.eq.s32.totalorder %s28, 0
      %p181 = por %p179, %p180
      %s183 = sadd.s32 %s182, 1
      %p186 = scmp.eq.s32.totalorder %s22, 3
      %p187 = scmp.ne.s32.totalorder %s182, %s184
      %p188 = scmp.eq.s32.totalorder %s22, 0
      %p189 = por %p187, %p188
      %p190 = scmp.ne.s32.totalorder %s182, %s184
      %p191 = scmp.eq.s32.totalorder %s27, 3
      %p192 = por %p190, %p191
      %p193 = scmp.ne.s32.totalorder %s184, %s185
      %p194 = scmp.eq.s32.totalorder %s27, 0
      %p195 = por %p193, %p194
      %p196 = scmp.ne.s32.totalorder %s184, %s185
      %p197 = scmp.eq.s32.totalorder %s28, 3
      %p198 = por %p196, %p197
      %p200 = scmp.ne.s32.totalorder %s185, %s199
      %p201 = scmp.eq.s32.totalorder %s28, 0
      %p202 = por %p200, %p201
      %s204 = sadd.s32 %s203, 1
      %p207 = scmp.eq.s32.totalorder %s22, 3
      %p208 = scmp.ne.s32.totalorder %s203, %s205
      %p209 = scmp.eq.s32.totalorder %s22, 0
      %p210 = por %p208, %p209
      %p211 = scmp.ne.s32.totalorder %s203, %s205
      %p212 = scmp.eq.s32.totalorder %s27, 3
      %p213 = por %p211, %p212
      %p214 = scmp.ne.s32.totalorder %s205, %s206
      %p215 = scmp.eq.s32.totalorder %s27, 0
      %p216 = por %p214, %p215
      %p217 = scmp.ne.s32.totalorder %s205, %s206
      %p218 = scmp.eq.s32.totalorder %s28, 3
      %p219 = por %p217, %p218
      %p221 = scmp.ne.s32.totalorder %s206, %s220
      %p222 = scmp.eq.s32.totalorder %s28, 0
      %p223 = por %p221, %p222
      %s225 = sadd.s32 %s224, 1
      %p228 = scmp.eq.s32.totalorder %s22, 3
      %p229 = scmp.ne.s32.totalorder %s224, %s226
      %p230 = scmp.eq.s32.totalorder %s22, 0
      %p231 = por %p229, %p230
      %p232 = scmp.ne.s32.totalorder %s224, %s226
      %p233 = scmp.eq.s32.totalorder %s27, 3
      %p234 = por %p232, %p233
      %p235 = scmp.ne.s32.totalorder %s226, %s227
      %p236 = scmp.eq.s32.totalorder %s27, 0
      %p237 = por %p235, %p236
      %p238 = scmp.ne.s32.totalorder %s226, %s227
      %p239 = scmp.eq.s32.totalorder %s28, 3
      %p240 = por %p238, %p239
      %p242 = scmp.ne.s32.totalorder %s227, %s241
      %p243 = scmp.eq.s32.totalorder %s28, 0
      %p244 = por %p242, %p243
      %s246 = sadd.s32 %s245, 1
      %p249 = scmp.eq.s32.totalorder %s22, 3
      %p250 = scmp.ne.s32.totalorder %s245, %s247
      %p251 = scmp.eq.s32.totalorder %s22, 0
      %p252 = por %p250, %p251
      %p253 = scmp.ne.s32.totalorder %s245, %s247
      %p254 = scmp.eq.s32.totalorder %s27, 3
      %p255 = por %p253, %p254
      %p256 = scmp.ne.s32.totalorder %s247, %s248
      %p257 = scmp.eq.s32.totalorder %s27, 0
      %p258 = por %p256, %p257
      %p259 = scmp.ne.s32.totalorder %s247, %s248
      %p260 = scmp.eq.s32.totalorder %s28, 3
      %p261 = por %p259, %p260
      %p263 = scmp.ne.s32.totalorder %s248, %s262
      %p264 = scmp.eq.s32.totalorder %s28, 0
      %p265 = por %p263, %p264
      %s267 = sadd.s32 %s266, 1
      %p270 = scmp.eq.s32.totalorder %s22, 3
      %p271 = scmp.ne.s32.totalorder %s266, %s268
      %p272 = scmp.eq.s32.totalorder %s22, 0
      %p273 = por %p271, %p272
      %p274 = scmp.ne.s32.totalorder %s266, %s268
      %p275 = scmp.eq.s32.totalorder %s27, 3
      %p276 = por %p274, %p275
      %p277 = scmp.ne.s32.totalorder %s268, %s269
      %p278 = scmp.eq.s32.totalorder %s27, 0
      %p279 = por %p277, %p278
      %p280 = scmp.ne.s32.totalorder %s268, %s269
      %p281 = scmp.eq.s32.totalorder %s28, 3
      %p282 = por %p280, %p281
      %p284 = scmp.ne.s32.totalorder %s269, %s283
      %p285 = scmp.eq.s32.totalorder %s28, 0
      %p286 = por %p284, %p285
      %s288 = sadd.s32 %s287, 1
      %p291 = scmp.eq.s32.totalorder %s22, 3
      %p292 = scmp.ne.s32.totalorder %s287, %s289
      %p293 = scmp.eq.s32.totalorder %s22, 0
      %p294 = por %p292, %p293
      %p295 = scmp.ne.s32.totalorder %s287, %s289
      %p296 = scmp.eq.s32.totalorder %s27, 3
      %p297 = por %p295, %p296
      %p298 = scmp.ne.s32.totalorder %s289, %s290
      %p299 = scmp.eq.s32.totalorder %s27, 0
      %p300 = por %p298, %p299
      %p301 = scmp.ne.s32.totalorder %s289, %s290
      %p302 = scmp.eq.s32.totalorder %s28, 3
      %p303 = por %p301, %p302
      %p305 = scmp.ne.s32.totalorder %s290, %s304
      %p306 = scmp.eq.s32.totalorder %s28, 0
      %p307 = por %p305, %p306
      %s308 = ssub.s32 %s22, %s29
      %p309 = scmp.eq.s32.totalorder %s308, 0
      %s311 = sadd.s32 %s310, 1
      %s312 = scalar_select %p309, %s310, %s311
      %p315 = pneg %p309
      %p316 = scmp.eq.s32.totalorder %s22, 3
      %p317 = por %p315, %p316
      %p318 = scmp.ne.s32.totalorder %s310, %s313
      %p319 = scmp.eq.s32.totalorder %s22, 0
      %p320 = por %p318, %p319
      %p321 = scmp.ne.s32.totalorder %s310, %s313
      %p322 = scmp.eq.s32.totalorder %s27, 3
      %p323 = por %p321, %p322
      %p324 = scmp.ne.s32.totalorder %s313, %s314
      %p325 = scmp.eq.s32.totalorder %s27, 0
      %p326 = por %p324, %p325
      %p327 = scmp.ne.s32.totalorder %s313, %s314
      %p328 = scmp.eq.s32.totalorder %s28, 3
      %p329 = por %p327, %p328
      %p331 = scmp.ne.s32.totalorder %s314, %s330
      %p332 = scmp.eq.s32.totalorder %s28, 0
      %p333 = por %p331, %p332
      %p334 = scmp.le.s32.totalorder 1, %s22
      %p335 = scmp.lt.s32.totalorder %s22, 5
      %p336 = pnand %p334, %p335
      %p337 = pneg %p336
      // Predicated region
      $region9: #{tpu_custom_call.1} parent=5 // pred_check
        _
      $region10: #{tpu_custom_call.1} parent=5 // pred_check_branch
        %339 = sbr.rel (%p336) target = $region12
      $region11: #{tpu_custom_call.1} parent=5 // pred_region
        %s340 = ssub.s32 %s22, 1
        // Predicated region
        $region13: #{tpu_custom_call.1} parent=11 // pred_check
          %p341 = pneg %p69
        $region14: #{tpu_custom_call.1} parent=11 // pred_check_branch
          %343 = sbr.rel (%p341) target = $region16
        $region15: #{tpu_custom_call.1} parent=11 // pred_region
          _
        $region16: #{tpu_custom_call.1} parent=11 // pred_fallthru
          _
        // Predicated region
        $region17: #{tpu_custom_call.1} parent=11 // pred_check
          %p344 = pneg %p90
        $region18: #{tpu_custom_call.1} parent=11 // pred_check_branch
          %346 = sbr.rel (%p344) target = $region20
        $region19: #{tpu_custom_call.1} parent=11 // pred_region
          _
        $region20: #{tpu_custom_call.1} parent=11 // pred_fallthru
          _
        // Predicated region
        $region21: #{tpu_custom_call.1} parent=11 // pred_check
          %p347 = pneg %p111
        $region22: #{tpu_custom_call.1} parent=11 // pred_check_branch
          %349 = sbr.rel (%p347) target = $region24
        $region23: #{tpu_custom_call.1} parent=11 // pred_region
          _
        $region24: #{tpu_custom_call.1} parent=11 // pred_fallthru
          _
        // Predicated region
        $region25: #{tpu_custom_call.1} parent=11 // pred_check
          %p350 = pneg %p132
        $region26: #{tpu_custom_call.1} parent=11 // pred_check_branch
          %352 = sbr.rel (%p350) target = $region28
        $region27: #{tpu_custom_call.1} parent=11 // pred_region
          _
        $region28: #{tpu_custom_call.1} parent=11 // pred_fallthru
          _
        // Predicated region
        $region29: #{tpu_custom_call.1} parent=11 // pred_check
          %p353 = pneg %p153
        $region30: #{tpu_custom_call.1} parent=11 // pred_check_branch
          %355 = sbr.rel (%p353) target = $region32
        $region31: #{tpu_custom_call.1} parent=11 // pred_region
          _
        $region32: #{tpu_custom_call.1} parent=11 // pred_fallthru
          _
        // Predicated region
        $region33: #{tpu_custom_call.1} parent=11 // pred_check
          %p356 = pneg %p174
        $region34: #{tpu_custom_call.1} parent=11 // pred_check_branch
          %358 = sbr.rel (%p356) target = $region36
        $region35: #{tpu_custom_call.1} parent=11 // pred_region
          _
        $region36: #{tpu_custom_call.1} parent=11 // pred_fallthru
          _
        // Predicated region
        $region37: #{tpu_custom_call.1} parent=11 // pred_check
          %p359 = pneg %p195
        $region38: #{tpu_custom_call.1} parent=11 // pred_check_branch
          %361 = sbr.rel (%p359) target = $region40
        $region39: #{tpu_custom_call.1} parent=11 // pred_region
          _
        $region40: #{tpu_custom_call.1} parent=11 // pred_fallthru
          _
        // Predicated region
        $region41: #{tpu_custom_call.1} parent=11 // pred_check
          %p362 = pneg %p216
        $region42: #{tpu_custom_call.1} parent=11 // pred_check_branch
          %364 = sbr.rel (%p362) target = $region44
        $region43: #{tpu_custom_call.1} parent=11 // pred_region
          _
        $region44: #{tpu_custom_call.1} parent=11 // pred_fallthru
          _
        // Predicated region
        $region45: #{tpu_custom_call.1} parent=11 // pred_check
          %p365 = pneg %p237
        $region46: #{tpu_custom_call.1} parent=11 // pred_check_branch
          %367 = sbr.rel (%p365) target = $region48
        $region47: #{tpu_custom_call.1} parent=11 // pred_region
          _
        $region48: #{tpu_custom_call.1} parent=11 // pred_fallthru
          _
        // Predicated region
        $region49: #{tpu_custom_call.1} parent=11 // pred_check
          %p368 = pneg %p258
        $region50: #{tpu_custom_call.1} parent=11 // pred_check_branch
          %370 = sbr.rel (%p368) target = $region52
        $region51: #{tpu_custom_call.1} parent=11 // pred_region
          _
        $region52: #{tpu_custom_call.1} parent=11 // pred_fallthru
          _
        // Predicated region
        $region53: #{tpu_custom_call.1} parent=11 // pred_check
          %p371 = pneg %p279
        $region54: #{tpu_custom_call.1} parent=11 // pred_check_branch
          %373 = sbr.rel (%p371) target = $region56
        $region55: #{tpu_custom_call.1} parent=11 // pred_region
          _
        $region56: #{tpu_custom_call.1} parent=11 // pred_fallthru
          _
        // Predicated region
        $region57: #{tpu_custom_call.1} parent=11 // pred_check
          %p374 = pneg %p300
        $region58: #{tpu_custom_call.1} parent=11 // pred_check_branch
          %376 = sbr.rel (%p374) target = $region60
        $region59: #{tpu_custom_call.1} parent=11 // pred_region
          _
        $region60: #{tpu_custom_call.1} parent=11 // pred_fallthru
          _
      $region12: #{tpu_custom_call.1} parent=5 // pred_fallthru
        _
      %p377 = scmp.lt.s32.totalorder %s22, 4
      // Predicated region
      $region61: #{tpu_custom_call.1} parent=5 // pred_check
        %p378 = pneg %p377
      $region62: #{tpu_custom_call.1} parent=5 // pred_check_branch
        %380 = sbr.rel (%p378) target = $region64
      $region63: #{tpu_custom_call.1} parent=5 // pred_region
        // Predicated region
        $region65: #{tpu_custom_call.1} parent=63 // pred_check
          %p381 = pneg %p42
        $region66: #{tpu_custom_call.1} parent=63 // pred_check_branch
          %383 = sbr.rel (%p381) target = $region68
        $region67: #{tpu_custom_call.1} parent=63 // pred_region
          %s384 = smul.u32 4, %s22
          %p385 = scmp.lt.s32.totalorder %s384, 15
          %s386 = scalar_select %p385, %s384, 15
          %s387 = smul.addr %s386, 8
          %s388 = scalar_lea.vmem %s0, %s387
          %s389 = smul.u32 4, %s22
        $region68: #{tpu_custom_call.1} parent=63 // pred_fallthru
          _
      $region64: #{tpu_custom_call.1} parent=5 // pred_fallthru
        _
      %p390 = scmp.le.s32.totalorder 1, %s22
      %p391 = scmp.lt.s32.totalorder %s22, 5
      %p392 = pnand %p390, %p391
      %p393 = pneg %p392
      // Predicated region
      $region69: #{tpu_custom_call.1} parent=5 // pred_check
        _
      $region70: #{tpu_custom_call.1} parent=5 // pred_check_branch
        %395 = sbr.rel (%p392) target = $region72
      $region71: #{tpu_custom_call.1} parent=5 // pred_region
        %s396 = ssub.s32 %s22, 1
        %s397 = smul.u32 4, %s27
        %p398 = scmp.lt.s32.totalorder %s397, 15
        %s399 = scalar_select %p398, %s397, 15
        %s400 = smul.addr %s399, 8
        %s401 = scalar_lea.vmem %s0, %s400
        %p402 = pneg %p48
        %p403 = pneg %p45
        %p404 = pneg %p69
        %p405 = pneg %p66
        %p406 = pneg %p90
        %p407 = pneg %p87
        %p408 = pneg %p111
        %p409 = pneg %p108
        %p410 = pneg %p132
        %p411 = pneg %p129
        %p412 = pneg %p153
        %p413 = pneg %p150
        %p414 = pneg %p174
        %p415 = pneg %p171
        %p416 = pneg %p195
        %p417 = pneg %p192
        %p418 = pneg %p216
        %p419 = pneg %p213
        %p420 = pneg %p237
        %p421 = pneg %p234
        %p422 = pneg %p258
        %p423 = pneg %p255
        %p424 = pneg %p279
        %p425 = pneg %p276
        %p426 = pneg %p300
        %p427 = pneg %p297
        %p428 = pneg %p326
        %p429 = pneg %p323
        %s430 = sand.u32 %s313, 1
        %s431 = scalar_lea.sflag [#allocation3], %s430
        %s432 = sand.u32 %s313, 1
        %s433 = smul.addr %s432, 32
        %s434 = scalar_lea.vmem [#allocation2], %s433
        %s435 = smul.u32 4, %s27
        %p436 = scmp.lt.s32.totalorder %s435, 15
        %s437 = scalar_select %p436, %s435, 15
        %s438 = smul.addr %s437, 8
        %s439 = scalar_lea.vmem %s0, %s438
        %s440 = smul.u32 4, %s27
        %s441 = smul.u32 4, %s27
        %v442 = vld [vmem:[%s439] sm:$0xff]
        %v443 = vld [vmem:[%s439 + $0x8] sm:$0xff]
        %v444 = vld [vmem:[%s439 + $0x10] sm:$0xff]
        %v445 = vld [vmem:[%s439 + $0x18] sm:$0xff]
        %v446 = vld [vmem:[%s1] sm:$0xff]
        %v447 = vld [vmem:[%s1 + $0x8] sm:$0xff]
        %v448 = vld [vmem:[%s1 + $0x10] sm:$0xff]
        %v449 = vld [vmem:[%s1 + $0x18] sm:$0xff]
        %v450 = vld [vmem:[%s1 + $0x20] sm:$0xff]
        %v451 = vld [vmem:[%s1 + $0x28] sm:$0xff]
        %v452 = vld [vmem:[%s1 + $0x30] sm:$0xff]
        %v453 = vld [vmem:[%s1 + $0x38] sm:$0xff]
        %v454 = vld [vmem:[%s1 + $0x40] sm:$0xff]
        %v455 = vld [vmem:[%s1 + $0x48] sm:$0xff]
        %v456 = vld [vmem:[%s1 + $0x50] sm:$0xff]
        %v457 = vld [vmem:[%s1 + $0x58] sm:$0xff]
        %v458 = vld [vmem:[%s1 + $0x60] sm:$0xff]
        %v459 = vld [vmem:[%s1 + $0x68] sm:$0xff]
        %v460 = vld [vmem:[%s1 + $0x70] sm:$0xff]
        %v461 = vld [vmem:[%s1 + $0x78] sm:$0xff]
        %v462 = vld [vmem:[%s2] sm:$0x1]
        %v464 = vlaneseq
        %v465 = vshrl.u32 %v464, 7
        %v466 = vsub.s32 0, %v465
        %v467 = vrot.slane %v462, %v466
        %469 = vmatprep.subr.mxu0 0.0
        %470 = vmatpush1.msra.mxu0 %v446
        %471 = vmatprep.subr.mxu0 0.0
        %472 = vmatpush1.msra.mxu0 %v447
        %473 = vmatprep.subr.mxu0 0.0
        %474 = vmatpush1.msra.mxu0 %v448
        %475 = vmatprep.subr.mxu0 0.0
        %476 = vmatpush1.msra.mxu0 %v449
        %477 = vmatprep.subr.mxu0 0.0
        %478 = vmatpush1.msra.mxu0 %v450
        %479 = vmatprep.subr.mxu0 0.0
        %480 = vmatpush1.msra.mxu0 %v451
        %481 = vmatprep.subr.mxu0 0.0
        %482 = vmatpush1.msra.mxu0 %v452
        %483 = vmatprep.subr.mxu0 0.0
        %484 = vmatpush1.msra.mxu0 %v453
        %485 = vmatprep.subr.mxu0 0.0
        %486 = vmatpush1.msra.mxu0 %v454
        %487 = vmatprep.subr.mxu0 0.0
        %488 = vmatpush1.msra.mxu0 %v455
        %489 = vmatprep.subr.mxu0 0.0
        %490 = vmatpush1.msra.mxu0 %v456
        %491 = vmatprep.subr.mxu0 0.0
        %492 = vmatpush1.msra.mxu0 %v457
        %493 = vmatprep.subr.mxu0 0.0
        %494 = vmatpush1.msra.mxu0 %v458
        %495 = vmatprep.subr.mxu0 0.0
        %496 = vmatpush1.msra.mxu0 %v459
        %497 = vmatprep.subr.mxu0 0.0
        %498 = vmatpush1.msra.mxu0 %v460
        %499 = vmatprep.subr.mxu0 0.0
        %500 = vmatpush1.msra.mxu0 %v461
        %501 = vmatprep.subr.mxu0 0.0
        %502 = vmatpush1.msra.mxu0 0.0
        %503 = vmatprep.subr.mxu0 0.0
        %504 = vmatpush1.msra.mxu0 0.0
        %505 = vmatprep.subr.mxu0 0.0
        %506 = vmatpush1.msra.mxu0 0.0
        %507 = vmatprep.subr.mxu0 0.0
        %508 = vmatpush1.msra.mxu0 0.0
        %509 = vmatprep.subr.mxu0 0.0
        %510 = vmatpush1.msra.mxu0 0.0
        %511 = vmatprep.subr.mxu0 0.0
        %512 = vmatpush1.msra.mxu0 0.0
        %513 = vmatprep.subr.mxu0 0.0
        %514 = vmatpush1.msra.mxu0 0.0
        %515 = vmatprep.subr.mxu0 0.0
        %516 = vmatpush1.msra.mxu0 0.0
        %517 = vmatprep.subr.mxu0 0.0
        %518 = vmatpush1.msra.mxu0 0.0
        %519 = vmatprep.subr.mxu0 0.0
        %520 = vmatpush1.msra.mxu0 0.0
        %521 = vmatprep.subr.mxu0 0.0
        %522 = vmatpush1.msra.mxu0 0.0
        %523 = vmatprep.subr.mxu0 0.0
        %524 = vmatpush1.msra.mxu0 0.0
        %525 = vmatprep.subr.mxu0 0.0
        %526 = vmatpush1.msra.mxu0 0.0
        %527 = vmatprep.subr.mxu0 0.0
        %528 = vmatpush1.msra.mxu0 0.0
        %529 = vmatprep.subr.mxu0 0.0
        %530 = vmatpush1.msra.mxu0 0.0
        %531 = vmatprep.subr.mxu0 0.0
        %532 = vmatpush1.msra.mxu0 0.0
        %533 = vmatprep.mubr.f32.mxu0 0.0
        %534 = vmatmul.mubr.f32.gmra.mrb[0].mxu0 %v442
        %v535 = vpop.f32.mrb[0].mxu0
        %v536 = vadd.f32 %v467, %v535
        %v537 = vpop.f32.mrb[0].mxu0
        %538 = vmatprep.mubr.f32.mxu0 0.0
        %539 = vmatmul.mubr.f32.gmra.mrb[0].mxu0 %v443
        %v540 = vpop.f32.mrb[0].mxu0
        %v541 = vadd.f32 %v467, %v540
        %v542 = vpop.f32.mrb[0].mxu0
        %543 = vmatprep.mubr.f32.mxu0 0.0
        %544 = vmatmul.mubr.f32.gmra.mrb[0].mxu0 %v444
        %v545 = vpop.f32.mrb[0].mxu0
        %v546 = vadd.f32 %v467, %v545
        %v547 = vpop.f32.mrb[0].mxu0
        %548 = vmatprep.mubr.f32.mxu0 0.0
        %549 = vmatmul.mubr.f32.gmra.mrb[0].mxu0 %v445
        %v550 = vpop.f32.mrb[0].mxu0
        %v551 = vadd.f32 %v467, %v550
        %v552 = vpop.f32.mrb[0].mxu0
        %553 = vdwg.mxu0
        %v554 = vtanh.pop %v536
        %v555 = vtanh.pop %v541
        %v556 = vtanh.pop %v546
        %v557 = vtanh.pop %v551
        %v558 = vld [vmem:[%s3] sm:$0xff]
        %v559 = vld [vmem:[%s3 + $0x8] sm:$0xff]
        %v560 = vld [vmem:[%s3 + $0x10] sm:$0xff]
        %v561 = vld [vmem:[%s3 + $0x18] sm:$0xff]
        %v562 = vld [vmem:[%s3 + $0x20] sm:$0xff]
        %v563 = vld [vmem:[%s3 + $0x28] sm:$0xff]
        %v564 = vld [vmem:[%s3 + $0x30] sm:$0xff]
        %v565 = vld [vmem:[%s3 + $0x38] sm:$0xff]
        %v566 = vld [vmem:[%s4] sm:$0x1]
        %v568 = vlaneseq
        %v569 = vshrl.u32 %v568, 7
        %v570 = vsub.s32 0, %v569
        %v571 = vrot.slane %v566, %v570
        %vm573 = vcmask 523264
        %v575 = vsel %vm573, %v554, 0
        %v578 = vsel %vm573, %v555, 0
        %v581 = vsel %vm573, %v556, 0
        %v584 = vsel %vm573, %v557, 0
        %586 = vmatprep.subr.mxu0 0.0
        %587 = vmatpush1.msra.mxu0 %v558
        %588 = vmatprep.subr.mxu0 0.0
        %589 = vmatpush1.msra.mxu0 %v559
        %590 = vmatprep.subr.mxu0 0.0
        %591 = vmatpush1.msra.mxu0 %v560
        %592 = vmatprep.subr.mxu0 0.0
        %593 = vmatpush1.msra.mxu0 %v561
        %594 = vmatprep.subr.mxu0 0.0
        %595 = vmatpush1.msra.mxu0 %v562
        %596 = vmatprep.subr.mxu0 0.0
        %597 = vmatpush1.msra.mxu0 %v563
        %598 = vmatprep.subr.mxu0 0.0
        %599 = vmatpush1.msra.mxu0 %v564
        %600 = vmatprep.subr.mxu0 0.0
        %601 = vmatpush1.msra.mxu0 %v565
        %602 = vmatprep.subr.mxu0 0.0
        %603 = vmatpush1.msra.mxu0 0.0
        %604 = vmatprep.subr.mxu0 0.0
        %605 = vmatpush1.msra.mxu0 0.0
        %606 = vmatprep.subr.mxu0 0.0
        %607 = vmatpush1.msra.mxu0 0.0
        %608 = vmatprep.subr.mxu0 0.0
        %609 = vmatpush1.msra.mxu0 0.0
        %610 = vmatprep.subr.mxu0 0.0
        %611 = vmatpush1.msra.mxu0 0.0
        %612 = vmatprep.subr.mxu0 0.0
        %613 = vmatpush1.msra.mxu0 0.0
        %614 = vmatprep.subr.mxu0 0.0
        %615 = vmatpush1.msra.mxu0 0.0
        %616 = vmatprep.subr.mxu0 0.0
        %617 = vmatpush1.msra.mxu0 0.0
        %618 = vmatprep.subr.mxu0 0.0
        %619 = vmatpush1.msra.mxu0 0.0
        %620 = vmatprep.subr.mxu0 0.0
        %621 = vmatpush1.msra.mxu0 0.0
        %622 = vmatprep.subr.mxu0 0.0
        %623 = vmatpush1.msra.mxu0 0.0
        %624 = vmatprep.subr.mxu0 0.0
        %625 = vmatpush1.msra.mxu0 0.0
        %626 = vmatprep.subr.mxu0 0.0
        %627 = vmatpush1.msra.mxu0 0.0
        %628 = vmatprep.subr.mxu0 0.0
        %629 = vmatpush1.msra.mxu0 0.0
        %630 = vmatprep.subr.mxu0 0.0
        %631 = vmatpush1.msra.mxu0 0.0
        %632 = vmatprep.subr.mxu0 0.0
        %633 = vmatpush1.msra.mxu0 0.0
        %634 = vmatprep.subr.mxu0 0.0
        %635 = vmatpush1.msra.mxu0 0.0
        %636 = vmatprep.subr.mxu0 0.0
        %637 = vmatpush1.msra.mxu0 0.0
        %638 = vmatprep.subr.mxu0 0.0
        %639 = vmatpush1.msra.mxu0 0.0
        %640 = vmatprep.subr.mxu0 0.0
        %641 = vmatpush1.msra.mxu0 0.0
        %642 = vmatprep.subr.mxu0 0.0
        %643 = vmatpush1.msra.mxu0 0.0
        %644 = vmatprep.subr.mxu0 0.0
        %645 = vmatpush1.msra.mxu0 0.0
        %646 = vmatprep.subr.mxu0 0.0
        %647 = vmatpush1.msra.mxu0 0.0
        %648 = vmatprep.subr.mxu0 0.0
        %649 = vmatpush1.msra.mxu0 0.0
        %650 = vmatprep.mubr.f32.mxu0 0.0
        %651 = vmatmul.mubr.f32.gmra.mrb[0].mxu0 %v575
        %v652 = vpop.f32.mrb[0].mxu0
        %v653 = vadd.f32 %v571, %v652
        %v654 = vpop.f32.mrb[0].mxu0
        %655 = vmatprep.mubr.f32.mxu0 0.0
        %656 = vmatmul.mubr.f32.gmra.mrb[0].mxu0 %v578
        %v657 = vpop.f32.mrb[0].mxu0
        %v658 = vadd.f32 %v571, %v657
        %v659 = vpop.f32.mrb[0].mxu0
        %660 = vmatprep.mubr.f32.mxu0 0.0
        %661 = vmatmul.mubr.f32.gmra.mrb[0].mxu0 %v581
        %v662 = vpop.f32.mrb[0].mxu0
        %v663 = vadd.f32 %v571, %v662
        %v664 = vpop.f32.mrb[0].mxu0
        %665 = vmatprep.mubr.f32.mxu0 0.0
        %666 = vmatmul.mubr.f32.gmra.mrb[0].mxu0 %v584
        %v667 = vpop.f32.mrb[0].mxu0
        %v668 = vadd.f32 %v571, %v667
        %v669 = vpop.f32.mrb[0].mxu0
        %670 = vdwg.mxu0
        %v671 = vtanh.pop %v653
        %v672 = vtanh.pop %v658
        %v673 = vtanh.pop %v663
        %v674 = vtanh.pop %v668
        %v675 = vld [vmem:[%s5] sm:$0xff]
        %v676 = vld [vmem:[%s5 + $0x8] sm:$0xff]
        %v677 = vld [vmem:[%s5 + $0x10] sm:$0xff]
        %v678 = vld [vmem:[%s5 + $0x18] sm:$0xff]
        %v679 = vld [vmem:[%s6] sm:$0x1]
        %v681 = vlaneseq
        %v682 = vshrl.u32 %v681, 7
        %v683 = vsub.s32 0, %v682
        %v684 = vrot.slane %v679, %v683
        %vm686 = vcmask 261120
        %v688 = vsel %vm686, %v671, 0
        %v691 = vsel %vm686, %v672, 0
        %v694 = vsel %vm686, %v673, 0
        %v697 = vsel %vm686, %v674, 0
        %699 = vmatprep.subr.mxu0 0.0
        %700 = vmatpush1.msra.mxu0 %v675
        %701 = vmatprep.subr.mxu0 0.0
        %702 = vmatpush1.msra.mxu0 %v676
        %703 = vmatprep.subr.mxu0 0.0
        %704 = vmatpush1.msra.mxu0 %v677
        %705 = vmatprep.subr.mxu0 0.0
        %706 = vmatpush1.msra.mxu0 %v678
        %707 = vmatprep.subr.mxu0 0.0
        %708 = vmatpush1.msra.mxu0 0.0
        %709 = vmatprep.subr.mxu0 0.0
        %710 = vmatpush1.msra.mxu0 0.0
        %711 = vmatprep.subr.mxu0 0.0
        %712 = vmatpush1.msra.mxu0 0.0
        %713 = vmatprep.subr.mxu0 0.0
        %714 = vmatpush1.msra.mxu0 0.0
        %715 = vmatprep.subr.mxu0 0.0
        %716 = vmatpush1.msra.mxu0 0.0
        %717 = vmatprep.subr.mxu0 0.0
        %718 = vmatpush1.msra.mxu0 0.0
        %719 = vmatprep.subr.mxu0 0.0
        %720 = vmatpush1.msra.mxu0 0.0
        %721 = vmatprep.subr.mxu0 0.0
        %722 = vmatpush1.msra.mxu0 0.0
        %723 = vmatprep.subr.mxu0 0.0
        %724 = vmatpush1.msra.mxu0 0.0
        %725 = vmatprep.subr.mxu0 0.0
        %726 = vmatpush1.msra.mxu0 0.0
        %727 = vmatprep.subr.mxu0 0.0
        %728 = vmatpush1.msra.mxu0 0.0
        %729 = vmatprep.subr.mxu0 0.0
        %730 = vmatpush1.msra.mxu0 0.0
        %731 = vmatprep.subr.mxu0 0.0
        %732 = vmatpush1.msra.mxu0 0.0
        %733 = vmatprep.subr.mxu0 0.0
        %734 = vmatpush1.msra.mxu0 0.0
        %735 = vmatprep.subr.mxu0 0.0
        %736 = vmatpush1.msra.mxu0 0.0
        %737 = vmatprep.subr.mxu0 0.0
        %738 = vmatpush1.msra.mxu0 0.0
        %739 = vmatprep.subr.mxu0 0.0
        %740 = vmatpush1.msra.mxu0 0.0
        %741 = vmatprep.subr.mxu0 0.0
        %742 = vmatpush1.msra.mxu0 0.0
        %743 = vmatprep.subr.mxu0 0.0
        %744 = vmatpush1.msra.mxu0 0.0
        %745 = vmatprep.subr.mxu0 0.0
        %746 = vmatpush1.msra.mxu0 0.0
        %747 = vmatprep.subr.mxu0 0.0
        %748 = vmatpush1.msra.mxu0 0.0
        %749 = vmatprep.subr.mxu0 0.0
        %750 = vmatpush1.msra.mxu0 0.0
        %751 = vmatprep.subr.mxu0 0.0
        %752 = vmatpush1.msra.mxu0 0.0
        %753 = vmatprep.subr.mxu0 0.0
        %754 = vmatpush1.msra.mxu0 0.0
        %755 = vmatprep.subr.mxu0 0.0
        %756 = vmatpush1.msra.mxu0 0.0
        %757 = vmatprep.subr.mxu0 0.0
        %758 = vmatpush1.msra.mxu0 0.0
        %759 = vmatprep.subr.mxu0 0.0
        %760 = vmatpush1.msra.mxu0 0.0
        %761 = vmatprep.subr.mxu0 0.0
        %762 = vmatpush1.msra.mxu0 0.0
        %763 = vmatprep.mubr.f32.mxu0 0.0
        %764 = vmatmul.mubr.f32.gmra.mrb[0].mxu0 %v688
        %v765 = vpop.f32.mrb[0].mxu0
        %v766 = vadd.f32 %v684, %v765
        %v767 = vpop.f32.mrb[0].mxu0
        %768 = vmatprep.mubr.f32.mxu0 0.0
        %769 = vmatmul.mubr.f32.gmra.mrb[0].mxu0 %v691
        %v770 = vpop.f32.mrb[0].mxu0
        %v771 = vadd.f32 %v684, %v770
        %v772 = vpop.f32.mrb[0].mxu0
        %773 = vmatprep.mubr.f32.mxu0 0.0
        %774 = vmatmul.mubr.f32.gmra.mrb[0].mxu0 %v694
        %v775 = vpop.f32.mrb[0].mxu0
        %v776 = vadd.f32 %v684, %v775
        %v777 = vpop.f32.mrb[0].mxu0
        %778 = vmatprep.mubr.f32.mxu0 0.0
        %779 = vmatmul.mubr.f32.gmra.mrb[0].mxu0 %v697
        %v780 = vpop.f32.mrb[0].mxu0
        %v781 = vadd.f32 %v684, %v780
        %v782 = vpop.f32.mrb[0].mxu0
        %783 = vdwg.mxu0
        %v784 = vtanh.pop %v766
        %v785 = vtanh.pop %v771
        %v786 = vtanh.pop %v776
        %v787 = vtanh.pop %v781
        %v788 = vld [vmem:[%s7] sm:$0xff]
        %v789 = vld [vmem:[%s7 + $0x8] sm:$0xff]
        %v790 = vld [vmem:[%s8] sm:$0x1]
        %v792 = vlaneseq
        %v793 = vshrl.u32 %v792, 7
        %v794 = vsub.s32 0, %v793
        %v795 = vrot.slane %v790, %v794
        %vm797 = vcmask 130048
        %v799 = vsel %vm797, %v784, 0
        %v802 = vsel %vm797, %v785, 0
        %v805 = vsel %vm797, %v786, 0
        %v808 = vsel %vm797, %v787, 0
        %810 = vmatprep.subr.mxu0 0.0
        %811 = vmatpush1.msra.mxu0 %v788
        %812 = vmatprep.subr.mxu0 0.0
        %813 = vmatpush1.msra.mxu0 %v789
        %814 = vmatprep.subr.mxu0 0.0
        %815 = vmatpush1.msra.mxu0 0.0
        %816 = vmatprep.subr.mxu0 0.0
        %817 = vmatpush1.msra.mxu0 0.0
        %818 = vmatprep.subr.mxu0 0.0
        %819 = vmatpush1.msra.mxu0 0.0
        %820 = vmatprep.subr.mxu0 0.0
        %821 = vmatpush1.msra.mxu0 0.0
        %822 = vmatprep.subr.mxu0 0.0
        %823 = vmatpush1.msra.mxu0 0.0
        %824 = vmatprep.subr.mxu0 0.0
        %825 = vmatpush1.msra.mxu0 0.0
        %826 = vmatprep.subr.mxu0 0.0
        %827 = vmatpush1.msra.mxu0 0.0
        %828 = vmatprep.subr.mxu0 0.0
        %829 = vmatpush1.msra.mxu0 0.0
        %830 = vmatprep.subr.mxu0 0.0
        %831 = vmatpush1.msra.mxu0 0.0
        %832 = vmatprep.subr.mxu0 0.0
        %833 = vmatpush1.msra.mxu0 0.0
        %834 = vmatprep.subr.mxu0 0.0
        %835 = vmatpush1.msra.mxu0 0.0
        %836 = vmatprep.subr.mxu0 0.0
        %837 = vmatpush1.msra.mxu0 0.0
        %838 = vmatprep.subr.mxu0 0.0
        %839 = vmatpush1.msra.mxu0 0.0
        %840 = vmatprep.subr.mxu0 0.0
        %841 = vmatpush1.msra.mxu0 0.0
        %842 = vmatprep.subr.mxu0 0.0
        %843 = vmatpush1.msra.mxu0 0.0
        %844 = vmatprep.subr.mxu0 0.0
        %845 = vmatpush1.msra.mxu0 0.0
        %846 = vmatprep.subr.mxu0 0.0
        %847 = vmatpush1.msra.mxu0 0.0
        %848 = vmatprep.subr.mxu0 0.0
        %849 = vmatpush1.msra.mxu0 0.0
        %850 = vmatprep.subr.mxu0 0.0
        %851 = vmatpush1.msra.mxu0 0.0
        %852 = vmatprep.subr.mxu0 0.0
        %853 = vmatpush1.msra.mxu0 0.0
        %854 = vmatprep.subr.mxu0 0.0
        %855 = vmatpush1.msra.mxu0 0.0
        %856 = vmatprep.subr.mxu0 0.0
        %857 = vmatpush1.msra.mxu0 0.0
        %858 = vmatprep.subr.mxu0 0.0
        %859 = vmatpush1.msra.mxu0 0.0
        %860 = vmatprep.subr.mxu0 0.0
        %861 = vmatpush1.msra.mxu0 0.0
        %862 = vmatprep.subr.mxu0 0.0
        %863 = vmatpush1.msra.mxu0 0.0
        %864 = vmatprep.subr.mxu0 0.0
        %865 = vmatpush1.msra.mxu0 0.0
        %866 = vmatprep.subr.mxu0 0.0
        %867 = vmatpush1.msra.mxu0 0.0
        %868 = vmatprep.subr.mxu0 0.0
        %869 = vmatpush1.msra.mxu0 0.0
        %870 = vmatprep.subr.mxu0 0.0
        %871 = vmatpush1.msra.mxu0 0.0
        %872 = vmatprep.subr.mxu0 0.0
        %873 = vmatpush1.msra.mxu0 0.0
        %874 = vmatprep.mubr.f32.mxu0 0.0
        %875 = vmatmul.mubr.f32.gmra.mrb[0].mxu0 %v799
        %v876 = vpop.f32.mrb[0].mxu0
        %v877 = vadd.f32 %v795, %v876
        %v878 = vpop.f32.mrb[0].mxu0
        %879 = vmatprep.mubr.f32.mxu0 0.0
        %880 = vmatmul.mubr.f32.gmra.mrb[0].mxu0 %v802
        %v881 = vpop.f32.mrb[0].mxu0
        %v882 = vadd.f32 %v795, %v881
        %v883 = vpop.f32.mrb[0].mxu0
        %884 = vmatprep.mubr.f32.mxu0 0.0
        %885 = vmatmul.mubr.f32.gmra.mrb[0].mxu0 %v805
        %v886 = vpop.f32.mrb[0].mxu0
        %v887 = vadd.f32 %v795, %v886
        %v888 = vpop.f32.mrb[0].mxu0
        %889 = vmatprep.mubr.f32.mxu0 0.0
        %890 = vmatmul.mubr.f32.gmra.mrb[0].mxu0 %v808
        %v891 = vpop.f32.mrb[0].mxu0
        %v892 = vadd.f32 %v795, %v891
        %v893 = vpop.f32.mrb[0].mxu0
        %894 = vdwg.mxu0
        %v895 = vtanh.pop %v877
        %v896 = vtanh.pop %v882
        %v897 = vtanh.pop %v887
        %v898 = vtanh.pop %v892
        %v899 = vld [vmem:[%s9] sm:$0xff]
        %v900 = vld [vmem:[%s9 + $0x8] sm:$0xff]
        %v901 = vld [vmem:[%s9 + $0x10] sm:$0xff]
        %v902 = vld [vmem:[%s9 + $0x18] sm:$0xff]
        %v903 = vld [vmem:[%s10] sm:$0x1]
        %v905 = vlaneseq
        %v906 = vshrl.u32 %v905, 7
        %v907 = vsub.s32 0, %v906
        %v908 = vrot.slane %v903, %v907
        %v911 = vsel %vm686, %v895, 0
        %v914 = vsel %vm686, %v896, 0
        %v917 = vsel %vm686, %v897, 0
        %v920 = vsel %vm686, %v898, 0
        %922 = vmatprep.subr.mxu0 0.0
        %923 = vmatpush1.msra.mxu0 %v899
        %924 = vmatprep.subr.mxu0 0.0
        %925 = vmatpush1.msra.mxu0 %v900
        %926 = vmatprep.subr.mxu0 0.0
        %927 = vmatpush1.msra.mxu0 %v901
        %928 = vmatprep.subr.mxu0 0.0
        %929 = vmatpush1.msra.mxu0 %v902
        %930 = vmatprep.subr.mxu0 0.0
        %931 = vmatpush1.msra.mxu0 0.0
        %932 = vmatprep.subr.mxu0 0.0
        %933 = vmatpush1.msra.mxu0 0.0
        %934 = vmatprep.subr.mxu0 0.0
        %935 = vmatpush1.msra.mxu0 0.0
        %936 = vmatprep.subr.mxu0 0.0
        %937 = vmatpush1.msra.mxu0 0.0
        %938 = vmatprep.subr.mxu0 0.0
        %939 = vmatpush1.msra.mxu0 0.0
        %940 = vmatprep.subr.mxu0 0.0
        %941 = vmatpush1.msra.mxu0 0.0
        %942 = vmatprep.subr.mxu0 0.0
        %943 = vmatpush1.msra.mxu0 0.0
        %944 = vmatprep.subr.mxu0 0.0
        %945 = vmatpush1.msra.mxu0 0.0
        %946 = vmatprep.subr.mxu0 0.0
        %947 = vmatpush1.msra.mxu0 0.0
        %948 = vmatprep.subr.mxu0 0.0
        %949 = vmatpush1.msra.mxu0 0.0
        %950 = vmatprep.subr.mxu0 0.0
        %951 = vmatpush1.msra.mxu0 0.0
        %952 = vmatprep.subr.mxu0 0.0
        %953 = vmatpush1.msra.mxu0 0.0
        %954 = vmatprep.subr.mxu0 0.0
        %955 = vmatpush1.msra.mxu0 0.0
        %956 = vmatprep.subr.mxu0 0.0
        %957 = vmatpush1.msra.mxu0 0.0
        %958 = vmatprep.subr.mxu0 0.0
        %959 = vmatpush1.msra.mxu0 0.0
        %960 = vmatprep.subr.mxu0 0.0
        %961 = vmatpush1.msra.mxu0 0.0
        %962 = vmatprep.subr.mxu0 0.0
        %963 = vmatpush1.msra.mxu0 0.0
        %964 = vmatprep.subr.mxu0 0.0
        %965 = vmatpush1.msra.mxu0 0.0
        %966 = vmatprep.subr.mxu0 0.0
        %967 = vmatpush1.msra.mxu0 0.0
        %968 = vmatprep.subr.mxu0 0.0
        %969 = vmatpush1.msra.mxu0 0.0
        %970 = vmatprep.subr.mxu0 0.0
        %971 = vmatpush1.msra.mxu0 0.0
        %972 = vmatprep.subr.mxu0 0.0
        %973 = vmatpush1.msra.mxu0 0.0
        %974 = vmatprep.subr.mxu0 0.0
        %975 = vmatpush1.msra.mxu0 0.0
        %976 = vmatprep.subr.mxu0 0.0
        %977 = vmatpush1.msra.mxu0 0.0
        %978 = vmatprep.subr.mxu0 0.0
        %979 = vmatpush1.msra.mxu0 0.0
        %980 = vmatprep.subr.mxu0 0.0
        %981 = vmatpush1.msra.mxu0 0.0
        %982 = vmatprep.subr.mxu0 0.0
        %983 = vmatpush1.msra.mxu0 0.0
        %984 = vmatprep.subr.mxu0 0.0
        %985 = vmatpush1.msra.mxu0 0.0
        %986 = vmatprep.mubr.f32.mxu0 0.0
        %987 = vmatmul.mubr.f32.gmra.mrb[0].mxu0 %v911
        %v988 = vpop.f32.mrb[0].mxu0
        %v989 = vadd.f32 %v908, %v988
        %v990 = vpop.f32.mrb[0].mxu0
        %991 = vmatprep.mubr.f32.mxu0 0.0
        %992 = vmatmul.mubr.f32.gmra.mrb[0].mxu0 %v914
        %v993 = vpop.f32.mrb[0].mxu0
        %v994 = vadd.f32 %v908, %v993
        %v995 = vpop.f32.mrb[0].mxu0
        %996 = vmatprep.mubr.f32.mxu0 0.0
        %997 = vmatmul.mubr.f32.gmra.mrb[0].mxu0 %v917
        %v998 = vpop.f32.mrb[0].mxu0
        %v999 = vadd.f32 %v908, %v998
        %v1000 = vpop.f32.mrb[0].mxu0
        %1001 = vmatprep.mubr.f32.mxu0 0.0
        %1002 = vmatmul.mubr.f32.gmra.mrb[0].mxu0 %v920
        %v1003 = vpop.f32.mrb[0].mxu0
        %v1004 = vadd.f32 %v908, %v1003
        %v1005 = vpop.f32.mrb[0].mxu0
        %1006 = vdwg.mxu0
        %v1007 = vtanh.pop %v989
        %v1008 = vtanh.pop %v994
        %v1009 = vtanh.pop %v999
        %v1010 = vtanh.pop %v1004
        %v1011 = vld [vmem:[%s11] sm:$0xff]
        %v1012 = vld [vmem:[%s11 + $0x8] sm:$0xff]
        %v1013 = vld [vmem:[%s11 + $0x10] sm:$0xff]
        %v1014 = vld [vmem:[%s11 + $0x18] sm:$0xff]
        %v1015 = vld [vmem:[%s11 + $0x20] sm:$0xff]
        %v1016 = vld [vmem:[%s11 + $0x28] sm:$0xff]
        %v1017 = vld [vmem:[%s11 + $0x30] sm:$0xff]
        %v1018 = vld [vmem:[%s11 + $0x38] sm:$0xff]
        %v1019 = vld [vmem:[%s12] sm:$0x1]
        %v1021 = vlaneseq
        %v1022 = vshrl.u32 %v1021, 7
        %v1023 = vsub.s32 0, %v1022
        %v1024 = vrot.slane %v1019, %v1023
        %v1027 = vsel %vm573, %v1007, 0
        %v1030 = vsel %vm573, %v1008, 0
        %v1033 = vsel %vm573, %v1009, 0
        %v1036 = vsel %vm573, %v1010, 0
        %1038 = vmatprep.subr.mxu0 0.0
        %1039 = vmatpush1.msra.mxu0 %v1011
        %1040 = vmatprep.subr.mxu0 0.0
        %1041 = vmatpush1.msra.mxu0 %v1012
        %1042 = vmatprep.subr.mxu0 0.0
        %1043 = vmatpush1.msra.mxu0 %v1013
        %1044 = vmatprep.subr.mxu0 0.0
        %1045 = vmatpush1.msra.mxu0 %v1014
        %1046 = vmatprep.subr.mxu0 0.0
        %1047 = vmatpush1.msra.mxu0 %v1015
        %1048 = vmatprep.subr.mxu0 0.0
        %1049 = vmatpush1.msra.mxu0 %v1016
        %1050 = vmatprep.subr.mxu0 0.0
        %1051 = vmatpush1.msra.mxu0 %v1017
        %1052 = vmatprep.subr.mxu0 0.0
        %1053 = vmatpush1.msra.mxu0 %v1018
        %1054 = vmatprep.subr.mxu0 0.0
        %1055 = vmatpush1.msra.mxu0 0.0
        %1056 = vmatprep.subr.mxu0 0.0
        %1057 = vmatpush1.msra.mxu0 0.0
        %1058 = vmatprep.subr.mxu0 0.0
        %1059 = vmatpush1.msra.mxu0 0.0
        %1060 = vmatprep.subr.mxu0 0.0
        %1061 = vmatpush1.msra.mxu0 0.0
        %1062 = vmatprep.subr.mxu0 0.0
        %1063 = vmatpush1.msra.mxu0 0.0
        %1064 = vmatprep.subr.mxu0 0.0
        %1065 = vmatpush1.msra.mxu0 0.0
        %1066 = vmatprep.subr.mxu0 0.0
        %1067 = vmatpush1.msra.mxu0 0.0
        %1068 = vmatprep.subr.mxu0 0.0
        %1069 = vmatpush1.msra.mxu0 0.0
        %1070 = vmatprep.subr.mxu0 0.0
        %1071 = vmatpush1.msra.mxu0 0.0
        %1072 = vmatprep.subr.mxu0 0.0
        %1073 = vmatpush1.msra.mxu0 0.0
        %1074 = vmatprep.subr.mxu0 0.0
        %1075 = vmatpush1.msra.mxu0 0.0
        %1076 = vmatprep.subr.mxu0 0.0
        %1077 = vmatpush1.msra.mxu0 0.0
        %1078 = vmatprep.subr.mxu0 0.0
        %1079 = vmatpush1.msra.mxu0 0.0
        %1080 = vmatprep.subr.mxu0 0.0
        %1081 = vmatpush1.msra.mxu0 0.0
        %1082 = vmatprep.subr.mxu0 0.0
        %1083 = vmatpush1.msra.mxu0 0.0
        %1084 = vmatprep.subr.mxu0 0.0
        %1085 = vmatpush1.msra.mxu0 0.0
        %1086 = vmatprep.subr.mxu0 0.0
        %1087 = vmatpush1.msra.mxu0 0.0
        %1088 = vmatprep.subr.mxu0 0.0
        %1089 = vmatpush1.msra.mxu0 0.0
        %1090 = vmatprep.subr.mxu0 0.0
        %1091 = vmatpush1.msra.mxu0 0.0
        %1092 = vmatprep.subr.mxu0 0.0
        %1093 = vmatpush1.msra.mxu0 0.0
        %1094 = vmatprep.subr.mxu0 0.0
        %1095 = vmatpush1.msra.mxu0 0.0
        %1096 = vmatprep.subr.mxu0 0.0
        %1097 = vmatpush1.msra.mxu0 0.0
        %1098 = vmatprep.subr.mxu0 0.0
        %1099 = vmatpush1.msra.mxu0 0.0
        %1100 = vmatprep.subr.mxu0 0.0
        %1101 = vmatpush1.msra.mxu0 0.0
        %1102 = vmatprep.mubr.f32.mxu0 0.0
        %1103 = vmatmul.mubr.f32.gmra.mrb[0].mxu0 %v1027
        %v1104 = vpop.f32.mrb[0].mxu0
        %v1105 = vadd.f32 %v1024, %v1104
        %v1106 = vpop.f32.mrb[0].mxu0
        %1107 = vmatprep.mubr.f32.mxu0 0.0
        %1108 = vmatmul.mubr.f32.gmra.mrb[0].mxu0 %v1030
        %v1109 = vpop.f32.mrb[0].mxu0
        %v1110 = vadd.f32 %v1024, %v1109
        %v1111 = vpop.f32.mrb[0].mxu0
        %1112 = vmatprep.mubr.f32.mxu0 0.0
        %1113 = vmatmul.mubr.f32.gmra.mrb[0].mxu0 %v1033
        %v1114 = vpop.f32.mrb[0].mxu0
        %v1115 = vadd.f32 %v1024, %v1114
        %v1116 = vpop.f32.mrb[0].mxu0
        %1117 = vmatprep.mubr.f32.mxu0 0.0
        %1118 = vmatmul.mubr.f32.gmra.mrb[0].mxu0 %v1036
        %v1119 = vpop.f32.mrb[0].mxu0
        %v1120 = vadd.f32 %v1024, %v1119
        %v1121 = vpop.f32.mrb[0].mxu0
        %1122 = vdwg.mxu0
        %1123 = vst [vmem:[%s434] sm:$0xff] %v1105
        %1124 = vst [vmem:[%s434 + $0x8] sm:$0xff] %v1110
        %1125 = vst [vmem:[%s434 + $0x10] sm:$0xff] %v1115
        %1126 = vst [vmem:[%s434 + $0x18] sm:$0xff] %v1120
        %s1127 = sand.u32 %s313, 1
        %s1128 = scalar_lea.sflag [#allocation3], %s1127
        %s1129 = sand.u32 %s313, 1
        %s1130 = smul.addr %s1129, 32
        %s1131 = scalar_lea.vmem [#allocation2], %s1130
        // Predicated region
        $region73: #{tpu_custom_call.1} parent=71 // pred_check
          %p1132 = pneg %p323
        $region74: #{tpu_custom_call.1} parent=71 // pred_check_branch
          %1134 = sbr.rel (%p1132) target = $region76
        $region75: #{tpu_custom_call.1} parent=71 // pred_region
          %s1135 = smul.u32 4, %s27
          %s1137 = ssub.s32 512, 512
          %1138 = vsyncadd %s1128, %s1137
          %s1139 = smul.addr %s1135, 128
          %s1140 = scalar_lea.hbm %s13, %s1139
          %s1141 = sshll.u32 %s1131, 4
          %s1142 = int_to_ptr.vmem [resolvable:$true] %s1141
          %1147 = dma.vmem_to_hbm [thread:$0]  %s1142, 512, %s1140, %s1128, 128, 128, 8
        $region76: #{tpu_custom_call.1} parent=71 // pred_fallthru
          _
      $region72: #{tpu_custom_call.1} parent=5 // pred_fallthru
        _
      %p1148 = scmp.le.s32.totalorder 2, %s22
      // Predicated region
      $region77: #{tpu_custom_call.1} parent=5 // pred_check
        %p1149 = pneg %p1148
      $region78: #{tpu_custom_call.1} parent=5 // pred_check_branch
        %1151 = sbr.rel (%p1149) target = $region80
      $region79: #{tpu_custom_call.1} parent=5 // pred_region
        %s1152 = ssub.s32 %s22, 2
        // Predicated region
        $region81: #{tpu_custom_call.1} parent=79 // pred_check
          %p1153 = pneg %p329
        $region82: #{tpu_custom_call.1} parent=79 // pred_check_branch
          %1155 = sbr.rel (%p1153) target = $region84
        $region83: #{tpu_custom_call.1} parent=79 // pred_region
          %s1156 = sand.u32 %s314, 1
          %s1157 = scalar_lea.sflag [#allocation3], %s1156
          %s1158 = sand.u32 %s314, 1
          %s1159 = smul.addr %s1158, 32
          %s1160 = scalar_lea.vmem [#allocation2], %s1159
          %1161 = dma.done %s1157, 512
        $region84: #{tpu_custom_call.1} parent=79 // pred_fallthru
          _
      $region80: #{tpu_custom_call.1} parent=5 // pred_fallthru
        _
    $region6: #{tpu_custom_call.1} parent=1 // loop_footer
      %s26 = sadd.s32 1, %s22
    $region7: #{tpu_custom_call.1} parent=1 // loop_footer_branch
      %21 = sbr.rel target = $region3
    $region8: #{tpu_custom_call.1} parent=1 // loop_exit
      _
    %1162 = vsyncpa [#allocation3], 1
    %s1163 = scalar_lea.sflag [#allocation3], 1
    %1164 = vsyncpa %s1163, 1

</llo_original>
